<compile_context>
chip_gen: v5e
topology: v5e:2x2
jax: 0.10.0
libtpu: 0.0.40
codegen_flags: <defaults>
</compile_context>

<pallas_src>
import jax
import jax.numpy as jnp
from jax.experimental import pallas as pl
from jax.experimental.pallas import tpu as pltpu

LANE = 128          # lane width (last-dim alignment -> dense, unmasked stores)
BF16_SUBLANE = 16   # bf16 sublane packing (second-to-last dim alignment)


def _round_up(x, m):
    return (x + m - 1) // m * m


def mlp_kernel(x_ref, w1_ref, b1_ref, w2_ref, b2_ref, w3_ref, b3_ref, out_ref):
    # x arrives as raw f32; cast to bf16 on the VPU right before the MXU,
    # accumulate in f32, add f32 bias, ReLU.  Padded lanes stay exactly zero
    # (zero weight cols + zero bias lanes, ReLU(0)=0).
    x = x_ref[...].astype(jnp.bfloat16)

    h1 = jnp.dot(x, w1_ref[...], preferred_element_type=jnp.float32)
    h1 = jnp.maximum(h1 + b1_ref[...], 0.0)

    h2 = jnp.dot(h1.astype(jnp.bfloat16), w2_ref[...],
                 preferred_element_type=jnp.float32)
    h2 = jnp.maximum(h2 + b2_ref[...], 0.0)

    h3 = jnp.dot(h2.astype(jnp.bfloat16), w3_ref[...],
                 preferred_element_type=jnp.float32)
    # bf16 output keeps the store lane-dense (unmasked vst) at half the bytes.
    out_ref[...] = (h3 + b3_ref[...]).astype(out_ref.dtype)


def _pad2(a, rows, cols, dtype):
    out = jnp.zeros((rows, cols), dtype)
    return out.at[: a.shape[0], : a.shape[1]].set(a.astype(dtype))


def prepare_params(w1, b1, w2, b2, w3, b3):
    """One-time preprocessing (hoisted out of the forward pass):
    pad feature/output dims to 128 lanes and cast weights to bf16.
    Zero padding is exact (padded lanes carry zeros through ReLU)."""
    in_f, hid = w1.shape
    ncls = w3.shape[1]
    hid_p = _round_up(hid, LANE)
    cls_p = _round_up(ncls, LANE)
    return dict(
        w1=_pad2(w1, in_f, hid_p, jnp.bfloat16),           # (in_f, 128): no row pad, x stays unpadded
        b1=_pad2(b1.reshape(1, -1), 1, hid_p, jnp.float32),
        w2=_pad2(w2, hid_p, hid_p, jnp.bfloat16),
        b2=_pad2(b2.reshape(1, -1), 1, hid_p, jnp.float32),
        w3=_pad2(w3, hid_p, cls_p, jnp.bfloat16),
        b3=_pad2(b3.reshape(1, -1), 1, cls_p, jnp.float32),
        input_size=in_f,
        num_classes=ncls,
    )


def neural_network_forward(x, params, *, batch_tile=None):
    """x: (B, input_size) f32, params from prepare_params. Returns (B, num_classes) f32."""
    batch, in_f = x.shape
    assert in_f == params["input_size"]
    ncls = params["num_classes"]
    hid_p = params["w1"].shape[1]
    cls_p = params["w3"].shape[1]

    if batch_tile is None:
        b16 = _round_up(batch, BF16_SUBLANE)
        cap = 1024  # amortizes ~0.35us/step; a few MiB VMEM, fine on v5e/v6e/v7x
        if b16 <= BF16_SUBLANE:
            batch_tile = BF16_SUBLANE
        elif b16 <= cap:
            # >=2 grid steps so v7x's two TensorCores both get work.
            batch_tile = _round_up((b16 + 1) // 2, BF16_SUBLANE)
        else:
            batch_tile = cap
    batch_p = _round_up(batch, batch_tile)

    # Only the batch dim is padded, and only when needed; x stays f32 and
    # lane-unpadded, so there is no extra pad/cast pass over the activations.
    if batch_p == batch:
        xp = x
    else:
        xp = jnp.zeros((batch_p, in_f), x.dtype).at[:batch].set(x)

    grid = (batch_p // batch_tile,)

    flops = 2 * batch_p * (in_f * hid_p + hid_p * hid_p + hid_p * cls_p)
    bytes_accessed = (
        4 * xp.size                                                     # f32 activations in
        + 2 * (params["w1"].size + params["w2"].size + params["w3"].size)  # bf16 weights
        + 4 * (params["b1"].size + params["b2"].size + params["b3"].size)  # f32 biases
        + 2 * batch_p * cls_p                                           # bf16 output
    )

    out_p = pl.pallas_call(
        mlp_kernel,
        out_shape=jax.ShapeDtypeStruct((batch_p, cls_p), jnp.bfloat16),
        grid=grid,
        in_specs=[
            # x: tiled over batch; last dim = full (unpadded) input_size.
            pl.BlockSpec((batch_tile, in_f), lambda i: (i, 0)),
            # Weights/biases: constant index maps -> VMEM-resident across tiles.
            pl.BlockSpec((in_f, hid_p), lambda i: (0, 0)),
            pl.BlockSpec((1, hid_p), lambda i: (0, 0)),
            pl.BlockSpec((hid_p, hid_p), lambda i: (0, 0)),
            pl.BlockSpec((1, hid_p), lambda i: (0, 0)),
            pl.BlockSpec((hid_p, cls_p), lambda i: (0, 0)),
            pl.BlockSpec((1, cls_p), lambda i: (0, 0)),
        ],
        out_specs=pl.BlockSpec((batch_tile, cls_p), lambda i: (i, 0)),
        compiler_params=pltpu.CompilerParams(
            dimension_semantics=("parallel",),
            # NOTE: if batch_tile is ever pushed past ~2048, set
            # vmem_limit_bytes explicitly (v5e's scoped default is ~16 MiB).
        ),
        cost_estimate=pl.CostEstimate(
            flops=flops, transcendentals=0, bytes_accessed=bytes_accessed),
    )(xp, params["w1"], params["b1"], params["w2"], params["b2"],
      params["w3"], params["b3"])

    # Slice off batch/lane padding; return f32 like the PyTorch module.
    return out_p[:batch, :ncls].astype(jnp.float32)


def init_params(key, input_size, hidden_size, num_classes):
    # Deterministic synthetic init (Kaiming-uniform-ish like nn.Linear default).
    ks = jax.random.split(key, 6)

    def linear_init(kw, kb, fan_in, fan_out):
        bound = 1.0 / jnp.sqrt(fan_in)
        w = jax.random.uniform(kw, (fan_in, fan_out), jnp.float32, -bound, bound)
        b = jax.random.uniform(kb, (1, fan_out), jnp.float32, -bound, bound)
        return w, b

    w1, b1 = linear_init(ks[0], ks[1], input_size, hidden_size)
    w2, b2 = linear_init(ks[2], ks[3], hidden_size, hidden_size)
    w3, b3 = linear_init(ks[4], ks[5], hidden_size, num_classes)
    return w1, b1, w2, b2, w3, b3


if __name__ == "__main__":
    input_size, hidden_size, num_classes = 32, 64, 16
    batch = 8

    key = jax.random.PRNGKey(0)
    k_x, k_p = jax.random.split(key)
    x = jax.random.normal(k_x, (batch, input_size), jnp.float32)
    w1, b1, w2, b2, w3, b3 = init_params(k_p, input_size, hidden_size, num_classes)

    # One-time weight preprocessing (padding + bf16 cast), hoisted out of forward.
    prepared = prepare_params(w1, b1, w2, b2, w3, b3)

    out = neural_network_forward(x, prepared)
    out = jax.block_until_ready(out)

    # Reference in plain JAX (same math as the PyTorch module, f32 throughout).
    ref = jnp.maximum(x @ w1 + b1, 0.0)
    ref = jnp.maximum(ref @ w2 + b2, 0.0)
    ref = ref @ w3 + b3

    assert out.shape == (batch, num_classes)
    # Kernel feeds the MXU bf16 operands (f32 accumulation) and stores bf16,
    # so allow bf16-level error vs. the f32 reference.
    assert jnp.allclose(out, ref, atol=5e-2, rtol=5e-2), (
        float(jnp.max(jnp.abs(out - ref))))

    print("KERNEL_OK")
</pallas_src>

<mosaic_0001>
module attributes {stable_mosaic.version = 11 : i64} {
  func.func @mlp_kernel(%arg0: i32, %arg1: memref<16x32xf32, #tpu.memory_space<vmem>>, %arg2: memref<32x128xbf16, #tpu.memory_space<vmem>>, %arg3: memref<1x128xf32, #tpu.memory_space<vmem>>, %arg4: memref<128x128xbf16, #tpu.memory_space<vmem>>, %arg5: memref<1x128xf32, #tpu.memory_space<vmem>>, %arg6: memref<128x128xbf16, #tpu.memory_space<vmem>>, %arg7: memref<1x128xf32, #tpu.memory_space<vmem>>, %arg8: memref<16x128xbf16, #tpu.memory_space<vmem>>) attributes {dimension_semantics = [#tpu.dimension_semantics<parallel>], iteration_bounds = array<i64: 1>, scalar_prefetch = 0 : i64, scratch_operands = 0 : i64, tpu.core_type = #tpu.core_type<tc>, window_params = [{transform_indices = @transform_0, window_bounds = array<i64: 16, 32>}, {pipeline_mode = #tpu.pipeline_mode<synchronous>, transform_indices = @transform_1, window_bounds = array<i64: 32, 128>}, {pipeline_mode = #tpu.pipeline_mode<synchronous>, transform_indices = @transform_2, window_bounds = array<i64: 1, 128>}, {pipeline_mode = #tpu.pipeline_mode<synchronous>, transform_indices = @transform_3, window_bounds = array<i64: 128, 128>}, {pipeline_mode = #tpu.pipeline_mode<synchronous>, transform_indices = @transform_4, window_bounds = array<i64: 1, 128>}, {pipeline_mode = #tpu.pipeline_mode<synchronous>, transform_indices = @transform_5, window_bounds = array<i64: 128, 128>}, {pipeline_mode = #tpu.pipeline_mode<synchronous>, transform_indices = @transform_6, window_bounds = array<i64: 1, 128>}, {transform_indices = @transform_7, window_bounds = array<i64: 16, 128>}]} {
    %c0 = arith.constant 0 : index
    %c0_0 = arith.constant 0 : index
    %0 = vector.load %arg1[%c0, %c0_0] : memref<16x32xf32, #tpu.memory_space<vmem>>, vector<16x32xf32>
    %1 = arith.truncf %0 : vector<16x32xf32> to vector<16x32xbf16>
    %c0_1 = arith.constant 0 : index
    %c0_2 = arith.constant 0 : index
    %2 = vector.load %arg2[%c0_1, %c0_2] : memref<32x128xbf16, #tpu.memory_space<vmem>>, vector<32x128xbf16>
    %cst = arith.constant dense<0.000000e+00> : vector<16x128xf32>
    %3 = tpu.matmul %1, %2, %cst {dimension_numbers = #tpu.dot_dimension_numbers<[1], [0], [0], [1], [0, 0, 1, 1], [], []>} : vector<16x32xbf16>, vector<32x128xbf16>, vector<16x128xf32> -> vector<16x128xf32>
    %c0_3 = arith.constant 0 : index
    %c0_4 = arith.constant 0 : index
    %4 = vector.load %arg3[%c0_3, %c0_4] : memref<1x128xf32, #tpu.memory_space<vmem>>, vector<1x128xf32>
    %5 = vector.broadcast %4 : vector<1x128xf32> to vector<16x128xf32>
    %6 = arith.addf %3, %5 : vector<16x128xf32>
    %cst_5 = arith.constant 0.000000e+00 : f32
    %7 = vector.broadcast %cst_5 : f32 to vector<16x128xf32>
    %8 = arith.maximumf %6, %7 : vector<16x128xf32>
    %9 = arith.truncf %8 : vector<16x128xf32> to vector<16x128xbf16>
    %c0_6 = arith.constant 0 : index
    %c0_7 = arith.constant 0 : index
    %10 = vector.load %arg4[%c0_6, %c0_7] : memref<128x128xbf16, #tpu.memory_space<vmem>>, vector<128x128xbf16>
    %cst_8 = arith.constant dense<0.000000e+00> : vector<16x128xf32>
    %11 = tpu.matmul %9, %10, %cst_8 {dimension_numbers = #tpu.dot_dimension_numbers<[1], [0], [0], [1], [0, 0, 1, 1], [], []>} : vector<16x128xbf16>, vector<128x128xbf16>, vector<16x128xf32> -> vector<16x128xf32>
    %c0_9 = arith.constant 0 : index
    %c0_10 = arith.constant 0 : index
    %12 = vector.load %arg5[%c0_9, %c0_10] : memref<1x128xf32, #tpu.memory_space<vmem>>, vector<1x128xf32>
    %13 = vector.broadcast %12 : vector<1x128xf32> to vector<16x128xf32>
    %14 = arith.addf %11, %13 : vector<16x128xf32>
    %cst_11 = arith.constant 0.000000e+00 : f32
    %15 = vector.broadcast %cst_11 : f32 to vector<16x128xf32>
    %16 = arith.maximumf %14, %15 : vector<16x128xf32>
    %17 = arith.truncf %16 : vector<16x128xf32> to vector<16x128xbf16>
    %c0_12 = arith.constant 0 : index
    %c0_13 = arith.constant 0 : index
    %18 = vector.load %arg6[%c0_12, %c0_13] : memref<128x128xbf16, #tpu.memory_space<vmem>>, vector<128x128xbf16>
    %cst_14 = arith.constant dense<0.000000e+00> : vector<16x128xf32>
    %19 = tpu.matmul %17, %18, %cst_14 {dimension_numbers = #tpu.dot_dimension_numbers<[1], [0], [0], [1], [0, 0, 1, 1], [], []>} : vector<16x128xbf16>, vector<128x128xbf16>, vector<16x128xf32> -> vector<16x128xf32>
    %c0_15 = arith.constant 0 : index
    %c0_16 = arith.constant 0 : index
    %20 = vector.load %arg7[%c0_15, %c0_16] : memref<1x128xf32, #tpu.memory_space<vmem>>, vector<1x128xf32>
    %21 = vector.broadcast %20 : vector<1x128xf32> to vector<16x128xf32>
    %22 = arith.addf %19, %21 : vector<16x128xf32>
    %23 = arith.truncf %22 : vector<16x128xf32> to vector<16x128xbf16>
    %c0_17 = arith.constant 0 : index
    %c0_18 = arith.constant 0 : index
    %24 = vector.load %arg8[%c0_17, %c0_18] : memref<16x128xbf16, #tpu.memory_space<vmem>>, vector<16x128xbf16>
    tpu.vector_store %arg8[%c0_17, %c0_18], %23 {strides = array<i32>} : memref<16x128xbf16, #tpu.memory_space<vmem>>, vector<16x128xbf16>,
    return
  }
  func.func @transform_0(%arg0: i32) -> (i32, i32) {
    %c0_i32 = arith.constant 0 : i32
    %c0_i32_0 = arith.constant 0 : i32
    return %arg0, %c0_i32 : i32, i32
  }
  func.func @transform_1(%arg0: i32) -> (i32, i32) {
    %c0_i32 = arith.constant 0 : i32
    %c0_i32_0 = arith.constant 0 : i32
    %c0_i32_1 = arith.constant 0 : i32
    return %c0_i32, %c0_i32_0 : i32, i32
  }
  func.func @transform_2(%arg0: i32) -> (i32, i32) {
    %c0_i32 = arith.constant 0 : i32
    %c0_i32_0 = arith.constant 0 : i32
    %c0_i32_1 = arith.constant 0 : i32
    return %c0_i32, %c0_i32_0 : i32, i32
  }
  func.func @transform_3(%arg0: i32) -> (i32, i32) {
    %c0_i32 = arith.constant 0 : i32
    %c0_i32_0 = arith.constant 0 : i32
    %c0_i32_1 = arith.constant 0 : i32
    return %c0_i32, %c0_i32_0 : i32, i32
  }
  func.func @transform_4(%arg0: i32) -> (i32, i32) {
    %c0_i32 = arith.constant 0 : i32
    %c0_i32_0 = arith.constant 0 : i32
    %c0_i32_1 = arith.constant 0 : i32
    return %c0_i32, %c0_i32_0 : i32, i32
  }
  func.func @transform_5(%arg0: i32) -> (i32, i32) {
    %c0_i32 = arith.constant 0 : i32
    %c0_i32_0 = arith.constant 0 : i32
    %c0_i32_1 = arith.constant 0 : i32
    return %c0_i32, %c0_i32_0 : i32, i32
  }
  func.func @transform_6(%arg0: i32) -> (i32, i32) {
    %c0_i32 = arith.constant 0 : i32
    %c0_i32_0 = arith.constant 0 : i32
    %c0_i32_1 = arith.constant 0 : i32
    return %c0_i32, %c0_i32_0 : i32, i32
  }
  func.func @transform_7(%arg0: i32) -> (i32, i32) {
    %c0_i32 = arith.constant 0 : i32
    %c0_i32_0 = arith.constant 0 : i32
    return %arg0, %c0_i32 : i32, i32
  }
}

</mosaic_0001>

<llo_original>
// kernel: tpu_custom_call.1
$region0: #{tpu_custom_call.1}
  #allocation0 [shape = 'u32[]', space=smem, size = 0x4, offset = 0x4, fixed_abs, tag = 'smem constant byte address 0x4 - core index']
  #allocation1 [shape = 'u32[72,128]{1,0:T(1,128)}', space=vmem, size = 0x9000, scoped, tag = 'internal scratch']
  %s0 = inlined_call_operand.hbm [shape: f32[16,32], index: 0, kind: input, shape index: {}]
  %s1 = inlined_call_operand.hbm [shape: bf16[32,128], index: 1, kind: input, shape index: {}]
  %s2 = inlined_call_operand.vmem [shape: f32[1,128], index: 2, kind: input, shape index: {}]
  %s3 = inlined_call_operand.hbm [shape: bf16[128,128], index: 3, kind: input, shape index: {}]
  %s4 = inlined_call_operand.vmem [shape: f32[1,128], index: 4, kind: input, shape index: {}]
  %s5 = inlined_call_operand.hbm [shape: bf16[128,128], index: 5, kind: input, shape index: {}]
  %s6 = inlined_call_operand.vmem [shape: f32[1,128], index: 6, kind: input, shape index: {}]
  %s7 = inlined_call_operand.hbm [shape: bf16[16,128], index: 7, kind: output, shape index: {}]
  %s8 = sld [smem:[#allocation0]]
  $region54: #{tpu_custom_call.1} parent=0
    _
  %s10 = ssub.s32 1, %s8
  %s11 = scalar_select 0, %s10, %s8
  $region1: #{tpu_custom_call.1} parent=0
    #allocation2 [shape = 'u8[8192]{0}', space=vmem, size = 0x2000, scoped, tag = 'input window, operand 0, single buffered']
    #allocation3 [shape = 's32[1]{0}', space=sflag, size = 0x4, scoped, tag = 'scoped memory for tpu_custom_call.1']
    #allocation4 [shape = 's32[1]{0}', space=sflag, size = 0x4, scoped, tag = 'scoped memory for tpu_custom_call.1']
    #allocation5 [shape = 'u8[8192]{0}', space=vmem, size = 0x2000, scoped, tag = 'input window, operand 1, single buffered']
    #allocation6 [shape = 's32[1]{0}', space=sflag, size = 0x4, scoped, tag = 'scoped memory for tpu_custom_call.1']
    #allocation7 [shape = 'u8[32768]{0}', space=vmem, size = 0x8000, scoped, tag = 'input window, operand 3, single buffered']
    #allocation8 [shape = 'u8[32768]{0}', space=vmem, size = 0x8000, scoped, tag = 'input window, operand 5, single buffered']
    #allocation9 [shape = 's32[1]{0}', space=sflag, size = 0x4, scoped, tag = 'scoped memory for tpu_custom_call.1']
    #allocation10 [shape = 'u8[4096]{0}', space=vmem, size = 0x1000, scoped, tag = 'output window, operand 0, single buffered']
    %12 = vsyncpa [#allocation3], 0
    %13 = vsyncpa [#allocation6], 0
    %14 = vsyncpa [#allocation9], 0
    %15 = vsyncpa [#allocation4], 0
    // Predicated region
    $region2: #{tpu_custom_call.1} parent=1 // pred_check
      _
    $region3: #{tpu_custom_call.1} parent=1 // pred_check_branch
      %17 = sbr.rel (0) target = $region5
    $region4: #{tpu_custom_call.1} parent=1 // pred_region
      %19 = vsyncadd [#allocation3], 0
      %s20 = sshll.u32 %s0, 4
      %s21 = int_to_ptr.hbm [resolvable:$true] %s20
      %s22 = sshll.u32 [#allocation2], 4
      %s23 = int_to_ptr.vmem [resolvable:$true] %s22
      %28 = dma.hbm_to_vmem [thread:$0]  %s21, 256, %s23, [#allocation3], 128, 128, 8
    $region5: #{tpu_custom_call.1} parent=1 // pred_fallthru
      _
    // Predicated region
    $region6: #{tpu_custom_call.1} parent=1 // pred_check
      _
    $region7: #{tpu_custom_call.1} parent=1 // pred_check_branch
      %30 = sbr.rel (0) target = $region9
    $region8: #{tpu_custom_call.1} parent=1 // pred_region
      %32 = vsyncadd [#allocation6], 0
      %s33 = sshll.u32 %s1, 4
      %s34 = int_to_ptr.hbm [resolvable:$true] %s33
      %s35 = sshll.u32 [#allocation5], 4
      %s36 = int_to_ptr.vmem [resolvable:$true] %s35
      %41 = dma.hbm_to_vmem [thread:$0]  %s34, 256, %s36, [#allocation6], 64, 64, 4
    $region9: #{tpu_custom_call.1} parent=1 // pred_fallthru
      _
    // Predicated region
    $region10: #{tpu_custom_call.1} parent=1 // pred_check
      _
    $region11: #{tpu_custom_call.1} parent=1 // pred_check_branch
      %43 = sbr.rel (0) target = $region13
    $region12: #{tpu_custom_call.1} parent=1 // pred_region
      _
    $region13: #{tpu_custom_call.1} parent=1 // pred_fallthru
      _
    // Predicated region
    $region14: #{tpu_custom_call.1} parent=1 // pred_check
      _
    $region15: #{tpu_custom_call.1} parent=1 // pred_check_branch
      %45 = sbr.rel (0) target = $region17
    $region16: #{tpu_custom_call.1} parent=1 // pred_region
      %47 = vsyncadd [#allocation6], 0
      %s48 = sshll.u32 %s3, 4
      %s49 = int_to_ptr.hbm [resolvable:$true] %s48
      %s50 = sshll.u32 [#allocation7], 4
      %s51 = int_to_ptr.vmem [resolvable:$true] %s50
      %56 = dma.hbm_to_vmem [thread:$0]  %s49, 1024, %s51, [#allocation6], 64, 64, 4
    $region17: #{tpu_custom_call.1} parent=1 // pred_fallthru
      _
    // Predicated region
    $region18: #{tpu_custom_call.1} parent=1 // pred_check
      _
    $region19: #{tpu_custom_call.1} parent=1 // pred_check_branch
      %58 = sbr.rel (0) target = $region21
    $region20: #{tpu_custom_call.1} parent=1 // pred_region
      _
    $region21: #{tpu_custom_call.1} parent=1 // pred_fallthru
      _
    // Predicated region
    $region22: #{tpu_custom_call.1} parent=1 // pred_check
      _
    $region23: #{tpu_custom_call.1} parent=1 // pred_check_branch
      %60 = sbr.rel (0) target = $region25
    $region24: #{tpu_custom_call.1} parent=1 // pred_region
      %62 = vsyncadd [#allocation9], 0
      %s63 = sshll.u32 %s5, 4
      %s64 = int_to_ptr.hbm [resolvable:$true] %s63
      %s65 = sshll.u32 [#allocation8], 4
      %s66 = int_to_ptr.vmem [resolvable:$true] %s65
      %71 = dma.hbm_to_vmem [thread:$0]  %s64, 1024, %s66, [#allocation9], 64, 64, 4
    $region25: #{tpu_custom_call.1} parent=1 // pred_fallthru
      _
    // Predicated region
    $region26: #{tpu_custom_call.1} parent=1 // pred_check
      _
    $region27: #{tpu_custom_call.1} parent=1 // pred_check_branch
      %73 = sbr.rel (0) target = $region29
    $region28: #{tpu_custom_call.1} parent=1 // pred_region
      _
    $region29: #{tpu_custom_call.1} parent=1 // pred_fallthru
      _
    // Predicated region
    $region30: #{tpu_custom_call.1} parent=1 // pred_check
      _
    $region31: #{tpu_custom_call.1} parent=1 // pred_check_branch
      %75 = sbr.rel (0) target = $region33
    $region32: #{tpu_custom_call.1} parent=1 // pred_region
      %77 = dma.done [#allocation3], 256
    $region33: #{tpu_custom_call.1} parent=1 // pred_fallthru
      _
    // Predicated region
    $region34: #{tpu_custom_call.1} parent=1 // pred_check
      _
    $region35: #{tpu_custom_call.1} parent=1 // pred_check_branch
      %79 = sbr.rel (0) target = $region37
    $region36: #{tpu_custom_call.1} parent=1 // pred_region
      %81 = dma.done [#allocation6], 256
    $region37: #{tpu_custom_call.1} parent=1 // pred_fallthru
      _
    // Predicated region
    $region38: #{tpu_custom_call.1} parent=1 // pred_check
      _
    $region39: #{tpu_custom_call.1} parent=1 // pred_check_branch
      %83 = sbr.rel (0) target = $region41
    $region40: #{tpu_custom_call.1} parent=1 // pred_region
      %85 = dma.done [#allocation6], 1024
    $region41: #{tpu_custom_call.1} parent=1 // pred_fallthru
      _
    // Predicated region
    $region42: #{tpu_custom_call.1} parent=1 // pred_check
      _
    $region43: #{tpu_custom_call.1} parent=1 // pred_check_branch
      %87 = sbr.rel (0) target = $region45
    $region44: #{tpu_custom_call.1} parent=1 // pred_region
      %89 = dma.done [#allocation9], 1024
    $region45: #{tpu_custom_call.1} parent=1 // pred_fallthru
      _
    %v91 = vld [vmem:[#allocation2] sm:$0xff]
    %v92 = vld [vmem:[#allocation2 + $0x8] sm:$0xff]
    %v93 = vpack.c.bf16 %v92, %v91
    %v94 = vld [vmem:[#allocation5] sm:$0xf]
    %v95 = vld [vmem:[#allocation5 + $0x4] sm:$0xf]
    %v96 = vld [vmem:[#allocation5 + $0x8] sm:$0xf]
    %v97 = vld [vmem:[#allocation5 + $0xc] sm:$0xf]
    %v98 = vld [vmem:[%s2] sm:$0x1]
    %v100 = vperm.slane %v98, 0
    %v106 = vunpack.c.l.b16 %v94
    %v107 = vunpack.c.l.b16 %v95
    %v108 = vunpack.c.l.b16 %v96
    %v109 = vunpack.c.l.b16 %v97
    %v110 = vpack.c.b16 %v107, %v106
    %v111 = vpack.c.b16 %v109, %v108
    %vm114 = vcmask 261120
    %v116 = vsel %vm114, %v93, 0
    %118 = vmatpush.bf16.msra.mxu0 0
    %119 = vmatpush.bf16.msra.mxu0 0
    %120 = vmatpush.bf16.msra.mxu0 0
    %121 = vmatpush.bf16.msra.mxu0 0
    %122 = vmatpush.bf16.msra.mxu0 0
    %123 = vmatpush.bf16.msra.mxu0 0
    %124 = vmatpush.bf16.msra.mxu0 %v111
    %125 = vmatpush.bf16.msra.mxu0 %v110
    %126 = vmatmul.bf16.gmra.mxu0 %v116
    %v127 = vpop.f32.mrf.mxu0
    %v128 = vadd.f32 %v100, %v127
    %v129 = vpop.f32.mrf.mxu0
    %v130 = vadd.f32 %v100, %v129
    %131 = vdwg.mxu0
    %v132 = vmax.f32 %v128, 0.0
    %v133 = vmax.f32 %v130, 0.0
    %v134 = vpack.c.bf16 %v133, %v132
    %v135 = vld [vmem:[#allocation7] sm:$0xf]
    %v136 = vld [vmem:[#allocation7 + $0x4] sm:$0xf]
    %v137 = vld [vmem:[#allocation7 + $0x8] sm:$0xf]
    %v138 = vld [vmem:[#allocation7 + $0xc] sm:$0xf]
    %v139 = vld [vmem:[#allocation7 + $0x10] sm:$0xf]
    %v140 = vld [vmem:[#allocation7 + $0x14] sm:$0xf]
    %v141 = vld [vmem:[#allocation7 + $0x18] sm:$0xf]
    %v142 = vld [vmem:[#allocation7 + $0x1c] sm:$0xf]
    %v143 = vld [vmem:[#allocation7 + $0x20] sm:$0xf]
    %v144 = vld [vmem:[#allocation7 + $0x24] sm:$0xf]
    %v145 = vld [vmem:[#allocation7 + $0x28] sm:$0xf]
    %v146 = vld [vmem:[#allocation7 + $0x2c] sm:$0xf]
    %v147 = vld [vmem:[#allocation7 + $0x30] sm:$0xf]
    %v148 = vld [vmem:[#allocation7 + $0x34] sm:$0xf]
    %v149 = vld [vmem:[#allocation7 + $0x38] sm:$0xf]
    %v150 = vld [vmem:[#allocation7 + $0x3c] sm:$0xf]
    %v151 = vld [vmem:[%s4] sm:$0x1]
    %v153 = vperm.slane %v151, 0
    %v171 = vunpack.c.l.b16 %v135
    %v172 = vunpack.c.l.b16 %v136
    %v173 = vunpack.c.l.b16 %v137
    %v174 = vunpack.c.l.b16 %v138
    %v175 = vunpack.c.l.b16 %v139
    %v176 = vunpack.c.l.b16 %v140
    %v177 = vunpack.c.l.b16 %v141
    %v178 = vunpack.c.l.b16 %v142
    %v179 = vunpack.c.l.b16 %v143
    %v180 = vunpack.c.l.b16 %v144
    %v181 = vunpack.c.l.b16 %v145
    %v182 = vunpack.c.l.b16 %v146
    %v183 = vunpack.c.l.b16 %v147
    %v184 = vunpack.c.l.b16 %v148
    %v185 = vunpack.c.l.b16 %v149
    %v186 = vunpack.c.l.b16 %v150
    %v187 = vpack.c.b16 %v172, %v171
    %v188 = vpack.c.b16 %v174, %v173
    %v189 = vpack.c.b16 %v176, %v175
    %v190 = vpack.c.b16 %v178, %v177
    %v191 = vpack.c.b16 %v180, %v179
    %v192 = vpack.c.b16 %v182, %v181
    %v193 = vpack.c.b16 %v184, %v183
    %v194 = vpack.c.b16 %v186, %v185
    %203 = vmatpush.bf16.msra.mxu0 %v194
    %204 = vmatpush.bf16.msra.mxu0 %v193
    %205 = vmatpush.bf16.msra.mxu0 %v192
    %206 = vmatpush.bf16.msra.mxu0 %v191
    %207 = vmatpush.bf16.msra.mxu0 %v190
    %208 = vmatpush.bf16.msra.mxu0 %v189
    %209 = vmatpush.bf16.msra.mxu0 %v188
    %210 = vmatpush.bf16.msra.mxu0 %v187
    %211 = vmatmul.bf16.gmra.mxu0 %v134
    %v212 = vpop.f32.mrf.mxu0
    %v213 = vadd.f32 %v153, %v212
    %v214 = vpop.f32.mrf.mxu0
    %v215 = vadd.f32 %v153, %v214
    %216 = vdwg.mxu0
    %v217 = vmax.f32 %v213, 0.0
    %v218 = vmax.f32 %v215, 0.0
    %v219 = vpack.c.bf16 %v218, %v217
    %v220 = vld [vmem:[#allocation8] sm:$0xf]
    %v221 = vld [vmem:[#allocation8 + $0x4] sm:$0xf]
    %v222 = vld [vmem:[#allocation8 + $0x8] sm:$0xf]
    %v223 = vld [vmem:[#allocation8 + $0xc] sm:$0xf]
    %v224 = vld [vmem:[#allocation8 + $0x10] sm:$0xf]
    %v225 = vld [vmem:[#allocation8 + $0x14] sm:$0xf]
    %v226 = vld [vmem:[#allocation8 + $0x18] sm:$0xf]
    %v227 = vld [vmem:[#allocation8 + $0x1c] sm:$0xf]
    %v228 = vld [vmem:[#allocation8 + $0x20] sm:$0xf]
    %v229 = vld [vmem:[#allocation8 + $0x24] sm:$0xf]
    %v230 = vld [vmem:[#allocation8 + $0x28] sm:$0xf]
    %v231 = vld [vmem:[#allocation8 + $0x2c] sm:$0xf]
    %v232 = vld [vmem:[#allocation8 + $0x30] sm:$0xf]
    %v233 = vld [vmem:[#allocation8 + $0x34] sm:$0xf]
    %v234 = vld [vmem:[#allocation8 + $0x38] sm:$0xf]
    %v235 = vld [vmem:[#allocation8 + $0x3c] sm:$0xf]
    %v236 = vld [vmem:[%s6] sm:$0x1]
    %v238 = vperm.slane %v236, 0
    %v256 = vunpack.c.l.b16 %v220
    %v257 = vunpack.c.l.b16 %v221
    %v258 = vunpack.c.l.b16 %v222
    %v259 = vunpack.c.l.b16 %v223
    %v260 = vunpack.c.l.b16 %v224
    %v261 = vunpack.c.l.b16 %v225
    %v262 = vunpack.c.l.b16 %v226
    %v263 = vunpack.c.l.b16 %v227
    %v264 = vunpack.c.l.b16 %v228
    %v265 = vunpack.c.l.b16 %v229
    %v266 = vunpack.c.l.b16 %v230
    %v267 = vunpack.c.l.b16 %v231
    %v268 = vunpack.c.l.b16 %v232
    %v269 = vunpack.c.l.b16 %v233
    %v270 = vunpack.c.l.b16 %v234
    %v271 = vunpack.c.l.b16 %v235
    %v272 = vpack.c.b16 %v257, %v256
    %v273 = vpack.c.b16 %v259, %v258
    %v274 = vpack.c.b16 %v261, %v260
    %v275 = vpack.c.b16 %v263, %v262
    %v276 = vpack.c.b16 %v265, %v264
    %v277 = vpack.c.b16 %v267, %v266
    %v278 = vpack.c.b16 %v269, %v268
    %v279 = vpack.c.b16 %v271, %v270
    %288 = vmatpush.bf16.msra.mxu0 %v279
    %289 = vmatpush.bf16.msra.mxu0 %v278
    %290 = vmatpush.bf16.msra.mxu0 %v277
    %291 = vmatpush.bf16.msra.mxu0 %v276
    %292 = vmatpush.bf16.msra.mxu0 %v275
    %293 = vmatpush.bf16.msra.mxu0 %v274
    %294 = vmatpush.bf16.msra.mxu0 %v273
    %295 = vmatpush.bf16.msra.mxu0 %v272
    %296 = vmatmul.bf16.gmra.mxu0 %v219
    %v297 = vpop.f32.mrf.mxu0
    %v298 = vadd.f32 %v238, %v297
    %v299 = vpop.f32.mrf.mxu0
    %v300 = vadd.f32 %v238, %v299
    %301 = vdwg.mxu0
    %v302 = vpack.c.bf16 %v298, %v298
    %v303 = vpack.c.bf16 %v300, %v300
    %304 = vst [vmem:[#allocation10] sm:$0xf] %v302
    %305 = vst [vmem:[#allocation10 + $0x4] sm:$0xf] %v303
    // Predicated region
    $region46: #{tpu_custom_call.1} parent=1 // pred_check
      _
    $region47: #{tpu_custom_call.1} parent=1 // pred_check_branch
      %307 = sbr.rel (0) target = $region49
    $region48: #{tpu_custom_call.1} parent=1 // pred_region
      %309 = vsyncadd [#allocation4], 0
      %s310 = sshll.u32 [#allocation10], 4
      %s311 = int_to_ptr.vmem [resolvable:$true] %s310
      %s312 = sshll.u32 %s7, 4
      %s313 = int_to_ptr.hbm [resolvable:$true] %s312
      %318 = dma.vmem_to_hbm [thread:$0]  %s311, 128, %s313, [#allocation4], 64, 64, 4
    $region49: #{tpu_custom_call.1} parent=1 // pred_fallthru
      _
    // Predicated region
    $region50: #{tpu_custom_call.1} parent=1 // pred_check
      _
    $region51: #{tpu_custom_call.1} parent=1 // pred_check_branch
      %320 = sbr.rel (0) target = $region53
    $region52: #{tpu_custom_call.1} parent=1 // pred_region
      %322 = dma.done [#allocation4], 128
    $region53: #{tpu_custom_call.1} parent=1 // pred_fallthru
      _
    %323 = vsyncpa [#allocation3], 1
    %324 = vsyncpa [#allocation6], 1
    %325 = vsyncpa [#allocation9], 1
    %326 = vsyncpa [#allocation4], 1

</llo_original>
